<compile_context>
chip_gen: v5e
topology: v5e:2x2
jax: 0.10.0
libtpu: 0.0.40
codegen_flags: <defaults>
</compile_context>

<pallas_src>
import functools

import numpy as np
import jax
import jax.numpy as jnp
from jax.experimental import pallas as pl
from jax.experimental.pallas import tpu as pltpu


# ----------------------------- Pallas kernel --------------------------------

def _nbeats_forward_kernel(x_ref, *refs, block_structs):
    """Fused NBEATS forward for one batch tile.

    refs = (param_ref_0, ..., param_ref_{n-1}, forecast_out_ref)

    Per-block param layout (all 2-D f32, biases shaped (1, dim)):
        [W_fc0, b_fc0, ..., W_fc{L-1}, b_fc{L-1},
         W_theta_b, W_theta_f, basis_b, basis_f, bias_b, bias_f]
    block_structs[i] = (num_fc_layers, relu_theta)
    """
    out_ref = refs[-1]
    prefs = refs[:-1]

    n_blocks = len(block_structs)
    backcast = x_ref[...].astype(jnp.float32)
    forecast = None

    idx = 0
    for bi, (num_fc, relu_theta) in enumerate(block_structs):
        # FC stack: Linear + ReLU, repeated num_fc times.
        h = backcast
        for _ in range(num_fc):
            w = prefs[idx][...]
            b = prefs[idx + 1][...]
            idx += 2
            h = jnp.maximum(
                jnp.dot(h, w, preferred_element_type=jnp.float32) + b, 0.0)

        w_tb = prefs[idx][...]
        w_tf = prefs[idx + 1][...]
        basis_b = prefs[idx + 2][...]
        basis_f = prefs[idx + 3][...]
        bias_b = prefs[idx + 4][...]
        bias_f = prefs[idx + 5][...]
        idx += 6

        theta_b = jnp.dot(h, w_tb, preferred_element_type=jnp.float32)
        theta_f = jnp.dot(h, w_tf, preferred_element_type=jnp.float32)
        if relu_theta:                      # generic block applies ReLU to thetas
            theta_b = jnp.maximum(theta_b, 0.0)
            theta_f = jnp.maximum(theta_f, 0.0)

        b_out = jnp.dot(theta_b, basis_b, preferred_element_type=jnp.float32) + bias_b
        f_out = jnp.dot(theta_f, basis_f, preferred_element_type=jnp.float32) + bias_f

        # Network-level residual logic (matches NBEATSNetwork.forward).
        if n_blocks == 1:
            forecast = f_out
        elif bi == 0:
            backcast = backcast - b_out
            forecast = f_out
        elif bi < n_blocks - 1:
            backcast = backcast - b_out
            forecast = forecast + f_out
        else:                               # last block: only forecast used
            forecast = forecast + f_out

    out_ref[...] = forecast.astype(out_ref.dtype)


# ------------------------------ wrapper --------------------------------------

def nbeats_prediction_forward(past_target, flat_params, block_structs,
                              prediction_length, batch_tile=256):
    """NBEATSPredictionNetwork.forward: (B, C) -> (B, 1, P)."""
    B, C = past_target.shape
    P = int(prediction_length)
    in_dtype = past_target.dtype

    # Batch tile: multiple of 8 sublanes, capped at `batch_tile` rows.
    tb = min(batch_tile, max(8, ((B + 7) // 8) * 8))
    Bp = ((B + tb - 1) // tb) * tb
    if Bp != B:
        x = jnp.zeros((Bp, C), in_dtype).at[:B].set(past_target)
    else:
        x = past_target
    grid = (Bp // tb,)

    x_spec = pl.BlockSpec((tb, C), lambda i: (i, 0))
    # Full-array, grid-invariant blocks: weights stay resident in VMEM.
    param_specs = [pl.BlockSpec(p.shape, lambda i: (0, 0)) for p in flat_params]
    out_spec = pl.BlockSpec((tb, P), lambda i: (i, 0))

    kernel = functools.partial(_nbeats_forward_kernel,
                               block_structs=tuple(block_structs))

    forecast = pl.pallas_call(
        kernel,
        out_shape=jax.ShapeDtypeStruct((Bp, P), jnp.float32),
        grid=grid,
        in_specs=[x_spec] + param_specs,
        out_specs=out_spec,
        compiler_params=pltpu.CompilerParams(
            dimension_semantics=("parallel",)),
    )(x, *flat_params)

    forecast = forecast[:B].astype(in_dtype)
    return forecast[:, None, :]                      # unsqueeze(1)


# ------------------------- parameter construction ----------------------------

def _linspace(backcast_length, forecast_length):
    ls = np.linspace(-backcast_length, forecast_length,
                     backcast_length + forecast_length, dtype=np.float32)
    return ls[:backcast_length], ls[backcast_length:]


def init_nbeats_params(key, *, prediction_length, context_length, num_stacks,
                       widths, num_blocks, num_block_layers,
                       expansion_coefficient_lengths, stack_types,
                       sharing=None):
    """Builds the flat parameter list + per-block structure descriptors."""
    del sharing  # present in the PyTorch constructor but unused in forward
    C, P = context_length, prediction_length
    b_ls, f_ls = _linspace(C, P)

    flat_params = []
    block_structs = []

    def dense_w(k, fan_in, fan_out):
        s = 1.0 / np.sqrt(fan_in)
        return jax.random.uniform(k, (fan_in, fan_out), jnp.float32, -s, s)

    def dense_b(k, fan_in, fan_out):
        s = 1.0 / np.sqrt(fan_in)
        return jax.random.uniform(k, (1, fan_out), jnp.float32, -s, s)

    for stack_id in range(num_stacks):
        U = widths[stack_id]
        L = num_block_layers[stack_id]
        st = stack_types[stack_id]
        for _ in range(num_blocks[stack_id]):
            # FC stack: Linear(C, U)+ReLU, then (L-1) x Linear(U, U)+ReLU.
            dims = [C] + [U] * L
            for layer in range(L):
                key, k1, k2 = jax.random.split(key, 3)
                flat_params.append(dense_w(k1, dims[layer], dims[layer + 1]))
                flat_params.append(dense_b(k2, dims[layer], dims[layer + 1]))

            if st == 'G':
                t = expansion_coefficient_lengths[stack_id]
                key, k1, k2, k3, k4, k5, k6 = jax.random.split(key, 7)
                w_tb = dense_w(k1, U, t)                 # theta_b_fc (no bias)
                w_tf = dense_w(k2, U, t)                 # theta_f_fc (no bias)
                basis_b = dense_w(k3, t, C)              # backcast_fc weight
                bias_b = dense_b(k4, t, C)               # backcast_fc bias
                basis_f = dense_w(k5, t, P)              # forecast_fc weight
                bias_f = dense_b(k6, t, P)               # forecast_fc bias
                relu_theta = True
            elif st == 'S':
                t = P                                    # nb_harmonics=None
                key, k1 = jax.random.split(key)
                w_shared = dense_w(k1, U, t)             # shared theta fc
                w_tb = w_tf = w_shared
                p1, p2 = (t // 2, t // 2) if t % 2 == 0 else (t // 2, t // 2 + 1)
                s_b = np.concatenate(
                    [np.stack([np.cos(2 * np.pi * i * b_ls) for i in range(p1)]),
                     np.stack([np.sin(2 * np.pi * i * b_ls) for i in range(p2)])])
                s_f = np.concatenate(
                    [np.stack([np.cos(2 * np.pi * i * f_ls) for i in range(p1)]),
                     np.stack([np.sin(2 * np.pi * i * f_ls) for i in range(p2)])])
                basis_b = jnp.asarray(s_b, jnp.float32)
                basis_f = jnp.asarray(s_f, jnp.float32)
                bias_b = jnp.zeros((1, C), jnp.float32)
                bias_f = jnp.zeros((1, P), jnp.float32)
                relu_theta = False
            else:                                        # 'T' trend
                t = expansion_coefficient_lengths[stack_id]
                key, k1 = jax.random.split(key)
                w_shared = dense_w(k1, U, t)             # shared theta fc
                w_tb = w_tf = w_shared
                basis_b = jnp.asarray(np.stack([b_ls ** i for i in range(t)]),
                                      jnp.float32)
                basis_f = jnp.asarray(np.stack([f_ls ** i for i in range(t)]),
                                      jnp.float32)
                bias_b = jnp.zeros((1, C), jnp.float32)
                bias_f = jnp.zeros((1, P), jnp.float32)
                relu_theta = False

            flat_params.extend([w_tb, w_tf, basis_b, basis_f, bias_b, bias_f])
            block_structs.append((L, relu_theta))

    return flat_params, block_structs


# --------------------------- pure-JAX reference -------------------------------

def nbeats_reference(past_target, flat_params, block_structs):
    x = past_target.astype(jnp.float32)
    n_blocks = len(block_structs)
    backcast, forecast = x, None
    idx = 0
    for bi, (L, relu_theta) in enumerate(block_structs):
        h = backcast
        for _ in range(L):
            w, b = flat_params[idx], flat_params[idx + 1]
            idx += 2
            h = jnp.maximum(h @ w + b, 0.0)
        w_tb, w_tf, basis_b, basis_f, bias_b, bias_f = flat_params[idx:idx + 6]
        idx += 6
        tb_, tf_ = h @ w_tb, h @ w_tf
        if relu_theta:
            tb_, tf_ = jnp.maximum(tb_, 0.0), jnp.maximum(tf_, 0.0)
        b_out = tb_ @ basis_b + bias_b
        f_out = tf_ @ basis_f + bias_f
        if n_blocks == 1:
            forecast = f_out
        elif bi == 0:
            backcast, forecast = backcast - b_out, f_out
        elif bi < n_blocks - 1:
            backcast, forecast = backcast - b_out, forecast + f_out
        else:
            forecast = forecast + f_out
    return forecast[:, None, :]


# ---------------------------------- main --------------------------------------

if __name__ == "__main__":
    key = jax.random.PRNGKey(0)

    B = 8
    context_length = 16
    prediction_length = 8
    cfg = dict(
        prediction_length=prediction_length,
        context_length=context_length,
        num_stacks=3,
        widths=[32, 32, 32],
        num_blocks=[1, 1, 1],
        num_block_layers=[2, 2, 2],
        expansion_coefficient_lengths=[8, 8, 4],
        stack_types=['G', 'S', 'T'],
        sharing=[False, True, True],
    )

    key, pkey, xkey = jax.random.split(key, 3)
    flat_params, block_structs = init_nbeats_params(pkey, **cfg)
    past_target = jax.random.normal(xkey, (B, context_length), jnp.float32)

    fwd = jax.jit(functools.partial(
        nbeats_prediction_forward,
        block_structs=tuple(block_structs),
        prediction_length=prediction_length))

    y = fwd(past_target, flat_params)
    y = jax.block_until_ready(y)

    ref = nbeats_reference(past_target, flat_params, block_structs)
    assert y.shape == (B, 1, prediction_length), y.shape
    assert jnp.allclose(y, ref, atol=1e-4, rtol=1e-4), \
        float(jnp.max(jnp.abs(y - ref)))

    # TODO(synk): smape/mape/mase loss helpers are training-time utilities and
    # are not part of the forward pass; they are intentionally not ported.
    print("KERNEL_OK")
</pallas_src>

<mosaic_0001>
module attributes {stable_mosaic.version = 11 : i64} {
  func.func @_nbeats_forward_kernel(%arg0: i32, %arg1: memref<8x16xf32, #tpu.memory_space<vmem>>, %arg2: memref<16x32xf32, #tpu.memory_space<vmem>>, %arg3: memref<1x32xf32, #tpu.memory_space<vmem>>, %arg4: memref<32x32xf32, #tpu.memory_space<vmem>>, %arg5: memref<1x32xf32, #tpu.memory_space<vmem>>, %arg6: memref<32x8xf32, #tpu.memory_space<vmem>>, %arg7: memref<32x8xf32, #tpu.memory_space<vmem>>, %arg8: memref<8x16xf32, #tpu.memory_space<vmem>>, %arg9: memref<8x8xf32, #tpu.memory_space<vmem>>, %arg10: memref<1x16xf32, #tpu.memory_space<vmem>>, %arg11: memref<1x8xf32, #tpu.memory_space<vmem>>, %arg12: memref<16x32xf32, #tpu.memory_space<vmem>>, %arg13: memref<1x32xf32, #tpu.memory_space<vmem>>, %arg14: memref<32x32xf32, #tpu.memory_space<vmem>>, %arg15: memref<1x32xf32, #tpu.memory_space<vmem>>, %arg16: memref<32x8xf32, #tpu.memory_space<vmem>>, %arg17: memref<32x8xf32, #tpu.memory_space<vmem>>, %arg18: memref<8x16xf32, #tpu.memory_space<vmem>>, %arg19: memref<8x8xf32, #tpu.memory_space<vmem>>, %arg20: memref<1x16xf32, #tpu.memory_space<vmem>>, %arg21: memref<1x8xf32, #tpu.memory_space<vmem>>, %arg22: memref<16x32xf32, #tpu.memory_space<vmem>>, %arg23: memref<1x32xf32, #tpu.memory_space<vmem>>, %arg24: memref<32x32xf32, #tpu.memory_space<vmem>>, %arg25: memref<1x32xf32, #tpu.memory_space<vmem>>, %arg26: memref<32x4xf32, #tpu.memory_space<vmem>>, %arg27: memref<32x4xf32, #tpu.memory_space<vmem>>, %arg28: memref<4x16xf32, #tpu.memory_space<vmem>>, %arg29: memref<4x8xf32, #tpu.memory_space<vmem>>, %arg30: memref<1x16xf32, #tpu.memory_space<vmem>>, %arg31: memref<1x8xf32, #tpu.memory_space<vmem>>, %arg32: memref<8x8xf32, #tpu.memory_space<vmem>>) attributes {dimension_semantics = [#tpu.dimension_semantics<parallel>], iteration_bounds = array<i64: 1>, scalar_prefetch = 0 : i64, scratch_operands = 0 : i64, tpu.core_type = #tpu.core_type<tc>, window_params = [{transform_indices = @transform_0, window_bounds = array<i64: 8, 16>}, {pipeline_mode = #tpu.pipeline_mode<synchronous>, transform_indices = @transform_1, window_bounds = array<i64: 16, 32>}, {pipeline_mode = #tpu.pipeline_mode<synchronous>, transform_indices = @transform_2, window_bounds = array<i64: 1, 32>}, {pipeline_mode = #tpu.pipeline_mode<synchronous>, transform_indices = @transform_3, window_bounds = array<i64: 32, 32>}, {pipeline_mode = #tpu.pipeline_mode<synchronous>, transform_indices = @transform_4, window_bounds = array<i64: 1, 32>}, {pipeline_mode = #tpu.pipeline_mode<synchronous>, transform_indices = @transform_5, window_bounds = array<i64: 32, 8>}, {pipeline_mode = #tpu.pipeline_mode<synchronous>, transform_indices = @transform_6, window_bounds = array<i64: 32, 8>}, {pipeline_mode = #tpu.pipeline_mode<synchronous>, transform_indices = @transform_7, window_bounds = array<i64: 8, 16>}, {pipeline_mode = #tpu.pipeline_mode<synchronous>, transform_indices = @transform_8, window_bounds = array<i64: 8, 8>}, {pipeline_mode = #tpu.pipeline_mode<synchronous>, transform_indices = @transform_9, window_bounds = array<i64: 1, 16>}, {pipeline_mode = #tpu.pipeline_mode<synchronous>, transform_indices = @transform_10, window_bounds = array<i64: 1, 8>}, {pipeline_mode = #tpu.pipeline_mode<synchronous>, transform_indices = @transform_11, window_bounds = array<i64: 16, 32>}, {pipeline_mode = #tpu.pipeline_mode<synchronous>, transform_indices = @transform_12, window_bounds = array<i64: 1, 32>}, {pipeline_mode = #tpu.pipeline_mode<synchronous>, transform_indices = @transform_13, window_bounds = array<i64: 32, 32>}, {pipeline_mode = #tpu.pipeline_mode<synchronous>, transform_indices = @transform_14, window_bounds = array<i64: 1, 32>}, {pipeline_mode = #tpu.pipeline_mode<synchronous>, transform_indices = @transform_15, window_bounds = array<i64: 32, 8>}, {pipeline_mode = #tpu.pipeline_mode<synchronous>, transform_indices = @transform_16, window_bounds = array<i64: 32, 8>}, {pipeline_mode = #tpu.pipeline_mode<synchronous>, transform_indices = @transform_17, window_bounds = array<i64: 8, 16>}, {pipeline_mode = #tpu.pipeline_mode<synchronous>, transform_indices = @transform_18, window_bounds = array<i64: 8, 8>}, {pipeline_mode = #tpu.pipeline_mode<synchronous>, transform_indices = @transform_19, window_bounds = array<i64: 1, 16>}, {pipeline_mode = #tpu.pipeline_mode<synchronous>, transform_indices = @transform_20, window_bounds = array<i64: 1, 8>}, {pipeline_mode = #tpu.pipeline_mode<synchronous>, transform_indices = @transform_21, window_bounds = array<i64: 16, 32>}, {pipeline_mode = #tpu.pipeline_mode<synchronous>, transform_indices = @transform_22, window_bounds = array<i64: 1, 32>}, {pipeline_mode = #tpu.pipeline_mode<synchronous>, transform_indices = @transform_23, window_bounds = array<i64: 32, 32>}, {pipeline_mode = #tpu.pipeline_mode<synchronous>, transform_indices = @transform_24, window_bounds = array<i64: 1, 32>}, {pipeline_mode = #tpu.pipeline_mode<synchronous>, transform_indices = @transform_25, window_bounds = array<i64: 32, 4>}, {pipeline_mode = #tpu.pipeline_mode<synchronous>, transform_indices = @transform_26, window_bounds = array<i64: 32, 4>}, {pipeline_mode = #tpu.pipeline_mode<synchronous>, transform_indices = @transform_27, window_bounds = array<i64: 4, 16>}, {pipeline_mode = #tpu.pipeline_mode<synchronous>, transform_indices = @transform_28, window_bounds = array<i64: 4, 8>}, {pipeline_mode = #tpu.pipeline_mode<synchronous>, transform_indices = @transform_29, window_bounds = array<i64: 1, 16>}, {pipeline_mode = #tpu.pipeline_mode<synchronous>, transform_indices = @transform_30, window_bounds = array<i64: 1, 8>}, {transform_indices = @transform_31, window_bounds = array<i64: 8, 8>}]} {
    %c0 = arith.constant 0 : index
    %c0_0 = arith.constant 0 : index
    %0 = vector.load %arg1[%c0, %c0_0] : memref<8x16xf32, #tpu.memory_space<vmem>>, vector<8x16xf32>
    %c0_1 = arith.constant 0 : index
    %c0_2 = arith.constant 0 : index
    %1 = vector.load %arg2[%c0_1, %c0_2] : memref<16x32xf32, #tpu.memory_space<vmem>>, vector<16x32xf32>
    %c0_3 = arith.constant 0 : index
    %c0_4 = arith.constant 0 : index
    %2 = vector.load %arg3[%c0_3, %c0_4] : memref<1x32xf32, #tpu.memory_space<vmem>>, vector<1x32xf32>
    %cst = arith.constant dense<0.000000e+00> : vector<8x32xf32>
    %3 = tpu.matmul %0, %1, %cst {dimension_numbers = #tpu.dot_dimension_numbers<[1], [0], [0], [1], [0, 0, 1, 1], [], []>} : vector<8x16xf32>, vector<16x32xf32>, vector<8x32xf32> -> vector<8x32xf32>
    %4 = vector.broadcast %2 : vector<1x32xf32> to vector<8x32xf32>
    %5 = arith.addf %3, %4 : vector<8x32xf32>
    %cst_5 = arith.constant 0.000000e+00 : f32
    %6 = vector.broadcast %cst_5 : f32 to vector<8x32xf32>
    %7 = arith.maximumf %5, %6 : vector<8x32xf32>
    %c0_6 = arith.constant 0 : index
    %c0_7 = arith.constant 0 : index
    %8 = vector.load %arg4[%c0_6, %c0_7] : memref<32x32xf32, #tpu.memory_space<vmem>>, vector<32x32xf32>
    %c0_8 = arith.constant 0 : index
    %c0_9 = arith.constant 0 : index
    %9 = vector.load %arg5[%c0_8, %c0_9] : memref<1x32xf32, #tpu.memory_space<vmem>>, vector<1x32xf32>
    %cst_10 = arith.constant dense<0.000000e+00> : vector<8x32xf32>
    %10 = tpu.matmul %7, %8, %cst_10 {dimension_numbers = #tpu.dot_dimension_numbers<[1], [0], [0], [1], [0, 0, 1, 1], [], []>} : vector<8x32xf32>, vector<32x32xf32>, vector<8x32xf32> -> vector<8x32xf32>
    %11 = vector.broadcast %9 : vector<1x32xf32> to vector<8x32xf32>
    %12 = arith.addf %10, %11 : vector<8x32xf32>
    %cst_11 = arith.constant 0.000000e+00 : f32
    %13 = vector.broadcast %cst_11 : f32 to vector<8x32xf32>
    %14 = arith.maximumf %12, %13 : vector<8x32xf32>
    %c0_12 = arith.constant 0 : index
    %c0_13 = arith.constant 0 : index
    %15 = vector.load %arg6[%c0_12, %c0_13] : memref<32x8xf32, #tpu.memory_space<vmem>>, vector<32x8xf32>
    %c0_14 = arith.constant 0 : index
    %c0_15 = arith.constant 0 : index
    %16 = vector.load %arg7[%c0_14, %c0_15] : memref<32x8xf32, #tpu.memory_space<vmem>>, vector<32x8xf32>
    %c0_16 = arith.constant 0 : index
    %c0_17 = arith.constant 0 : index
    %17 = vector.load %arg8[%c0_16, %c0_17] : memref<8x16xf32, #tpu.memory_space<vmem>>, vector<8x16xf32>
    %c0_18 = arith.constant 0 : index
    %c0_19 = arith.constant 0 : index
    %18 = vector.load %arg9[%c0_18, %c0_19] : memref<8x8xf32, #tpu.memory_space<vmem>>, vector<8x8xf32>
    %c0_20 = arith.constant 0 : index
    %c0_21 = arith.constant 0 : index
    %19 = vector.load %arg10[%c0_20, %c0_21] : memref<1x16xf32, #tpu.memory_space<vmem>>, vector<1x16xf32>
    %c0_22 = arith.constant 0 : index
    %c0_23 = arith.constant 0 : index
    %20 = vector.load %arg11[%c0_22, %c0_23] : memref<1x8xf32, #tpu.memory_space<vmem>>, vector<1x8xf32>
    %cst_24 = arith.constant dense<0.000000e+00> : vector<8x8xf32>
    %21 = tpu.matmul %14, %15, %cst_24 {dimension_numbers = #tpu.dot_dimension_numbers<[1], [0], [0], [1], [0, 0, 1, 1], [], []>} : vector<8x32xf32>, vector<32x8xf32>, vector<8x8xf32> -> vector<8x8xf32>
    %cst_25 = arith.constant dense<0.000000e+00> : vector<8x8xf32>
    %22 = tpu.matmul %14, %16, %cst_25 {dimension_numbers = #tpu.dot_dimension_numbers<[1], [0], [0], [1], [0, 0, 1, 1], [], []>} : vector<8x32xf32>, vector<32x8xf32>, vector<8x8xf32> -> vector<8x8xf32>
    %cst_26 = arith.constant 0.000000e+00 : f32
    %23 = vector.broadcast %cst_26 : f32 to vector<8x8xf32>
    %24 = arith.maximumf %21, %23 : vector<8x8xf32>
    %cst_27 = arith.constant 0.000000e+00 : f32
    %25 = vector.broadcast %cst_27 : f32 to vector<8x8xf32>
    %26 = arith.maximumf %22, %25 : vector<8x8xf32>
    %cst_28 = arith.constant dense<0.000000e+00> : vector<8x16xf32>
    %27 = tpu.matmul %24, %17, %cst_28 {dimension_numbers = #tpu.dot_dimension_numbers<[1], [0], [0], [1], [0, 0, 1, 1], [], []>} : vector<8x8xf32>, vector<8x16xf32>, vector<8x16xf32> -> vector<8x16xf32>
    %28 = vector.broadcast %19 : vector<1x16xf32> to vector<8x16xf32>
    %29 = arith.addf %27, %28 : vector<8x16xf32>
    %cst_29 = arith.constant dense<0.000000e+00> : vector<8x8xf32>
    %30 = tpu.matmul %26, %18, %cst_29 {dimension_numbers = #tpu.dot_dimension_numbers<[1], [0], [0], [1], [0, 0, 1, 1], [], []>} : vector<8x8xf32>, vector<8x8xf32>, vector<8x8xf32> -> vector<8x8xf32>
    %31 = vector.broadcast %20 : vector<1x8xf32> to vector<8x8xf32>
    %32 = arith.addf %30, %31 : vector<8x8xf32>
    %33 = arith.subf %0, %29 : vector<8x16xf32>
    %c0_30 = arith.constant 0 : index
    %c0_31 = arith.constant 0 : index
    %34 = vector.load %arg12[%c0_30, %c0_31] : memref<16x32xf32, #tpu.memory_space<vmem>>, vector<16x32xf32>
    %c0_32 = arith.constant 0 : index
    %c0_33 = arith.constant 0 : index
    %35 = vector.load %arg13[%c0_32, %c0_33] : memref<1x32xf32, #tpu.memory_space<vmem>>, vector<1x32xf32>
    %cst_34 = arith.constant dense<0.000000e+00> : vector<8x32xf32>
    %36 = tpu.matmul %33, %34, %cst_34 {dimension_numbers = #tpu.dot_dimension_numbers<[1], [0], [0], [1], [0, 0, 1, 1], [], []>} : vector<8x16xf32>, vector<16x32xf32>, vector<8x32xf32> -> vector<8x32xf32>
    %37 = vector.broadcast %35 : vector<1x32xf32> to vector<8x32xf32>
    %38 = arith.addf %36, %37 : vector<8x32xf32>
    %cst_35 = arith.constant 0.000000e+00 : f32
    %39 = vector.broadcast %cst_35 : f32 to vector<8x32xf32>
    %40 = arith.maximumf %38, %39 : vector<8x32xf32>
    %c0_36 = arith.constant 0 : index
    %c0_37 = arith.constant 0 : index
    %41 = vector.load %arg14[%c0_36, %c0_37] : memref<32x32xf32, #tpu.memory_space<vmem>>, vector<32x32xf32>
    %c0_38 = arith.constant 0 : index
    %c0_39 = arith.constant 0 : index
    %42 = vector.load %arg15[%c0_38, %c0_39] : memref<1x32xf32, #tpu.memory_space<vmem>>, vector<1x32xf32>
    %cst_40 = arith.constant dense<0.000000e+00> : vector<8x32xf32>
    %43 = tpu.matmul %40, %41, %cst_40 {dimension_numbers = #tpu.dot_dimension_numbers<[1], [0], [0], [1], [0, 0, 1, 1], [], []>} : vector<8x32xf32>, vector<32x32xf32>, vector<8x32xf32> -> vector<8x32xf32>
    %44 = vector.broadcast %42 : vector<1x32xf32> to vector<8x32xf32>
    %45 = arith.addf %43, %44 : vector<8x32xf32>
    %cst_41 = arith.constant 0.000000e+00 : f32
    %46 = vector.broadcast %cst_41 : f32 to vector<8x32xf32>
    %47 = arith.maximumf %45, %46 : vector<8x32xf32>
    %c0_42 = arith.constant 0 : index
    %c0_43 = arith.constant 0 : index
    %48 = vector.load %arg16[%c0_42, %c0_43] : memref<32x8xf32, #tpu.memory_space<vmem>>, vector<32x8xf32>
    %c0_44 = arith.constant 0 : index
    %c0_45 = arith.constant 0 : index
    %49 = vector.load %arg17[%c0_44, %c0_45] : memref<32x8xf32, #tpu.memory_space<vmem>>, vector<32x8xf32>
    %c0_46 = arith.constant 0 : index
    %c0_47 = arith.constant 0 : index
    %50 = vector.load %arg18[%c0_46, %c0_47] : memref<8x16xf32, #tpu.memory_space<vmem>>, vector<8x16xf32>
    %c0_48 = arith.constant 0 : index
    %c0_49 = arith.constant 0 : index
    %51 = vector.load %arg19[%c0_48, %c0_49] : memref<8x8xf32, #tpu.memory_space<vmem>>, vector<8x8xf32>
    %c0_50 = arith.constant 0 : index
    %c0_51 = arith.constant 0 : index
    %52 = vector.load %arg20[%c0_50, %c0_51] : memref<1x16xf32, #tpu.memory_space<vmem>>, vector<1x16xf32>
    %c0_52 = arith.constant 0 : index
    %c0_53 = arith.constant 0 : index
    %53 = vector.load %arg21[%c0_52, %c0_53] : memref<1x8xf32, #tpu.memory_space<vmem>>, vector<1x8xf32>
    %cst_54 = arith.constant dense<0.000000e+00> : vector<8x8xf32>
    %54 = tpu.matmul %47, %48, %cst_54 {dimension_numbers = #tpu.dot_dimension_numbers<[1], [0], [0], [1], [0, 0, 1, 1], [], []>} : vector<8x32xf32>, vector<32x8xf32>, vector<8x8xf32> -> vector<8x8xf32>
    %cst_55 = arith.constant dense<0.000000e+00> : vector<8x8xf32>
    %55 = tpu.matmul %47, %49, %cst_55 {dimension_numbers = #tpu.dot_dimension_numbers<[1], [0], [0], [1], [0, 0, 1, 1], [], []>} : vector<8x32xf32>, vector<32x8xf32>, vector<8x8xf32> -> vector<8x8xf32>
    %cst_56 = arith.constant dense<0.000000e+00> : vector<8x16xf32>
    %56 = tpu.matmul %54, %50, %cst_56 {dimension_numbers = #tpu.dot_dimension_numbers<[1], [0], [0], [1], [0, 0, 1, 1], [], []>} : vector<8x8xf32>, vector<8x16xf32>, vector<8x16xf32> -> vector<8x16xf32>
    %57 = vector.broadcast %52 : vector<1x16xf32> to vector<8x16xf32>
    %58 = arith.addf %56, %57 : vector<8x16xf32>
    %cst_57 = arith.constant dense<0.000000e+00> : vector<8x8xf32>
    %59 = tpu.matmul %55, %51, %cst_57 {dimension_numbers = #tpu.dot_dimension_numbers<[1], [0], [0], [1], [0, 0, 1, 1], [], []>} : vector<8x8xf32>, vector<8x8xf32>, vector<8x8xf32> -> vector<8x8xf32>
    %60 = vector.broadcast %53 : vector<1x8xf32> to vector<8x8xf32>
    %61 = arith.addf %59, %60 : vector<8x8xf32>
    %62 = arith.subf %33, %58 : vector<8x16xf32>
    %63 = arith.addf %32, %61 : vector<8x8xf32>
    %c0_58 = arith.constant 0 : index
    %c0_59 = arith.constant 0 : index
    %64 = vector.load %arg22[%c0_58, %c0_59] : memref<16x32xf32, #tpu.memory_space<vmem>>, vector<16x32xf32>
    %c0_60 = arith.constant 0 : index
    %c0_61 = arith.constant 0 : index
    %65 = vector.load %arg23[%c0_60, %c0_61] : memref<1x32xf32, #tpu.memory_space<vmem>>, vector<1x32xf32>
    %cst_62 = arith.constant dense<0.000000e+00> : vector<8x32xf32>
    %66 = tpu.matmul %62, %64, %cst_62 {dimension_numbers = #tpu.dot_dimension_numbers<[1], [0], [0], [1], [0, 0, 1, 1], [], []>} : vector<8x16xf32>, vector<16x32xf32>, vector<8x32xf32> -> vector<8x32xf32>
    %67 = vector.broadcast %65 : vector<1x32xf32> to vector<8x32xf32>
    %68 = arith.addf %66, %67 : vector<8x32xf32>
    %cst_63 = arith.constant 0.000000e+00 : f32
    %69 = vector.broadcast %cst_63 : f32 to vector<8x32xf32>
    %70 = arith.maximumf %68, %69 : vector<8x32xf32>
    %c0_64 = arith.constant 0 : index
    %c0_65 = arith.constant 0 : index
    %71 = vector.load %arg24[%c0_64, %c0_65] : memref<32x32xf32, #tpu.memory_space<vmem>>, vector<32x32xf32>
    %c0_66 = arith.constant 0 : index
    %c0_67 = arith.constant 0 : index
    %72 = vector.load %arg25[%c0_66, %c0_67] : memref<1x32xf32, #tpu.memory_space<vmem>>, vector<1x32xf32>
    %cst_68 = arith.constant dense<0.000000e+00> : vector<8x32xf32>
    %73 = tpu.matmul %70, %71, %cst_68 {dimension_numbers = #tpu.dot_dimension_numbers<[1], [0], [0], [1], [0, 0, 1, 1], [], []>} : vector<8x32xf32>, vector<32x32xf32>, vector<8x32xf32> -> vector<8x32xf32>
    %74 = vector.broadcast %72 : vector<1x32xf32> to vector<8x32xf32>
    %75 = arith.addf %73, %74 : vector<8x32xf32>
    %cst_69 = arith.constant 0.000000e+00 : f32
    %76 = vector.broadcast %cst_69 : f32 to vector<8x32xf32>
    %77 = arith.maximumf %75, %76 : vector<8x32xf32>
    %c0_70 = arith.constant 0 : index
    %c0_71 = arith.constant 0 : index
    %78 = vector.load %arg27[%c0_70, %c0_71] : memref<32x4xf32, #tpu.memory_space<vmem>>, vector<32x4xf32>
    %c0_72 = arith.constant 0 : index
    %c0_73 = arith.constant 0 : index
    %79 = vector.load %arg29[%c0_72, %c0_73] : memref<4x8xf32, #tpu.memory_space<vmem>>, vector<4x8xf32>
    %c0_74 = arith.constant 0 : index
    %c0_75 = arith.constant 0 : index
    %80 = vector.load %arg31[%c0_74, %c0_75] : memref<1x8xf32, #tpu.memory_space<vmem>>, vector<1x8xf32>
    %cst_76 = arith.constant dense<0.000000e+00> : vector<8x4xf32>
    %81 = tpu.matmul %77, %78, %cst_76 {dimension_numbers = #tpu.dot_dimension_numbers<[1], [0], [0], [1], [0, 0, 1, 1], [], []>} : vector<8x32xf32>, vector<32x4xf32>, vector<8x4xf32> -> vector<8x4xf32>
    %cst_77 = arith.constant dense<0.000000e+00> : vector<8x8xf32>
    %82 = tpu.matmul %81, %79, %cst_77 {dimension_numbers = #tpu.dot_dimension_numbers<[1], [0], [0], [1], [0, 0, 1, 1], [], []>} : vector<8x4xf32>, vector<4x8xf32>, vector<8x8xf32> -> vector<8x8xf32>
    %83 = vector.broadcast %80 : vector<1x8xf32> to vector<8x8xf32>
    %84 = arith.addf %82, %83 : vector<8x8xf32>
    %85 = arith.addf %63, %84 : vector<8x8xf32>
    %c0_78 = arith.constant 0 : index
    %c0_79 = arith.constant 0 : index
    %86 = vector.load %arg32[%c0_78, %c0_79] : memref<8x8xf32, #tpu.memory_space<vmem>>, vector<8x8xf32>
    tpu.vector_store %arg32[%c0_78, %c0_79], %85 {strides = array<i32>} : memref<8x8xf32, #tpu.memory_space<vmem>>, vector<8x8xf32>,
    return
  }
  func.func @transform_0(%arg0: i32) -> (i32, i32) {
    %c0_i32 = arith.constant 0 : i32
    %c0_i32_0 = arith.constant 0 : i32
    return %arg0, %c0_i32 : i32, i32
  }
  func.func @transform_1(%arg0: i32) -> (i32, i32) {
    %c0_i32 = arith.constant 0 : i32
    %c0_i32_0 = arith.constant 0 : i32
    %c0_i32_1 = arith.constant 0 : i32
    return %c0_i32, %c0_i32_0 : i32, i32
  }
  func.func @transform_2(%arg0: i32) -> (i32, i32) {
    %c0_i32 = arith.constant 0 : i32
    %c0_i32_0 = arith.constant 0 : i32
    %c0_i32_1 = arith.constant 0 : i32
    return %c0_i32, %c0_i32_0 : i32, i32
  }
  func.func @transform_3(%arg0: i32) -> (i32, i32) {
    %c0_i32 = arith.constant 0 : i32
    %c0_i32_0 = arith.constant 0 : i32
    %c0_i32_1 = arith.constant 0 : i32
    return %c0_i32, %c0_i32_0 : i32, i32
  }
  func.func @transform_4(%arg0: i32) -> (i32, i32) {
    %c0_i32 = arith.constant 0 : i32
    %c0_i32_0 = arith.constant 0 : i32
    %c0_i32_1 = arith.constant 0 : i32
    return %c0_i32, %c0_i32_0 : i32, i32
  }
  func.func @transform_5(%arg0: i32) -> (i32, i32) {
    %c0_i32 = arith.constant 0 : i32
    %c0_i32_0 = arith.constant 0 : i32
    %c0_i32_1 = arith.constant 0 : i32
    return %c0_i32, %c0_i32_0 : i32, i32
  }
  func.func @transform_6(%arg0: i32) -> (i32, i32) {
    %c0_i32 = arith.constant 0 : i32
    %c0_i32_0 = arith.constant 0 : i32
    %c0_i32_1 = arith.constant 0 : i32
    return %c0_i32, %c0_i32_0 : i32, i32
  }
  func.func @transform_7(%arg0: i32) -> (i32, i32) {
    %c0_i32 = arith.constant 0 : i32
    %c0_i32_0 = arith.constant 0 : i32
    %c0_i32_1 = arith.constant 0 : i32
    return %c0_i32, %c0_i32_0 : i32, i32
  }
  func.func @transform_8(%arg0: i32) -> (i32, i32) {
    %c0_i32 = arith.constant 0 : i32
    %c0_i32_0 = arith.constant 0 : i32
    %c0_i32_1 = arith.constant 0 : i32
    return %c0_i32, %c0_i32_0 : i32, i32
  }
  func.func @transform_9(%arg0: i32) -> (i32, i32) {
    %c0_i32 = arith.constant 0 : i32
    %c0_i32_0 = arith.constant 0 : i32
    %c0_i32_1 = arith.constant 0 : i32
    return %c0_i32, %c0_i32_0 : i32, i32
  }
  func.func @transform_10(%arg0: i32) -> (i32, i32) {
    %c0_i32 = arith.constant 0 : i32
    %c0_i32_0 = arith.constant 0 : i32
    %c0_i32_1 = arith.constant 0 : i32
    return %c0_i32, %c0_i32_0 : i32, i32
  }
  func.func @transform_11(%arg0: i32) -> (i32, i32) {
    %c0_i32 = arith.constant 0 : i32
    %c0_i32_0 = arith.constant 0 : i32
    %c0_i32_1 = arith.constant 0 : i32
    return %c0_i32, %c0_i32_0 : i32, i32
  }
  func.func @transform_12(%arg0: i32) -> (i32, i32) {
    %c0_i32 = arith.constant 0 : i32
    %c0_i32_0 = arith.constant 0 : i32
    %c0_i32_1 = arith.constant 0 : i32
    return %c0_i32, %c0_i32_0 : i32, i32
  }
  func.func @transform_13(%arg0: i32) -> (i32, i32) {
    %c0_i32 = arith.constant 0 : i32
    %c0_i32_0 = arith.constant 0 : i32
    %c0_i32_1 = arith.constant 0 : i32
    return %c0_i32, %c0_i32_0 : i32, i32
  }
  func.func @transform_14(%arg0: i32) -> (i32, i32) {
    %c0_i32 = arith.constant 0 : i32
    %c0_i32_0 = arith.constant 0 : i32
    %c0_i32_1 = arith.constant 0 : i32
    return %c0_i32, %c0_i32_0 : i32, i32
  }
  func.func @transform_15(%arg0: i32) -> (i32, i32) {
    %c0_i32 = arith.constant 0 : i32
    %c0_i32_0 = arith.constant 0 : i32
    %c0_i32_1 = arith.constant 0 : i32
    return %c0_i32, %c0_i32_0 : i32, i32
  }
  func.func @transform_16(%arg0: i32) -> (i32, i32) {
    %c0_i32 = arith.constant 0 : i32
    %c0_i32_0 = arith.constant 0 : i32
    %c0_i32_1 = arith.constant 0 : i32
    return %c0_i32, %c0_i32_0 : i32, i32
  }
  func.func @transform_17(%arg0: i32) -> (i32, i32) {
    %c0_i32 = arith.constant 0 : i32
    %c0_i32_0 = arith.constant 0 : i32
    %c0_i32_1 = arith.constant 0 : i32
    return %c0_i32, %c0_i32_0 : i32, i32
  }
  func.func @transform_18(%arg0: i32) -> (i32, i32) {
    %c0_i32 = arith.constant 0 : i32
    %c0_i32_0 = arith.constant 0 : i32
    %c0_i32_1 = arith.constant 0 : i32
    return %c0_i32, %c0_i32_0 : i32, i32
  }
  func.func @transform_19(%arg0: i32) -> (i32, i32) {
    %c0_i32 = arith.constant 0 : i32
    %c0_i32_0 = arith.constant 0 : i32
    %c0_i32_1 = arith.constant 0 : i32
    return %c0_i32, %c0_i32_0 : i32, i32
  }
  func.func @transform_20(%arg0: i32) -> (i32, i32) {
    %c0_i32 = arith.constant 0 : i32
    %c0_i32_0 = arith.constant 0 : i32
    %c0_i32_1 = arith.constant 0 : i32
    return %c0_i32, %c0_i32_0 : i32, i32
  }
  func.func @transform_21(%arg0: i32) -> (i32, i32) {
    %c0_i32 = arith.constant 0 : i32
    %c0_i32_0 = arith.constant 0 : i32
    %c0_i32_1 = arith.constant 0 : i32
    return %c0_i32, %c0_i32_0 : i32, i32
  }
  func.func @transform_22(%arg0: i32) -> (i32, i32) {
    %c0_i32 = arith.constant 0 : i32
    %c0_i32_0 = arith.constant 0 : i32
    %c0_i32_1 = arith.constant 0 : i32
    return %c0_i32, %c0_i32_0 : i32, i32
  }
  func.func @transform_23(%arg0: i32) -> (i32, i32) {
    %c0_i32 = arith.constant 0 : i32
    %c0_i32_0 = arith.constant 0 : i32
    %c0_i32_1 = arith.constant 0 : i32
    return %c0_i32, %c0_i32_0 : i32, i32
  }
  func.func @transform_24(%arg0: i32) -> (i32, i32) {
    %c0_i32 = arith.constant 0 : i32
    %c0_i32_0 = arith.constant 0 : i32
    %c0_i32_1 = arith.constant 0 : i32
    return %c0_i32, %c0_i32_0 : i32, i32
  }
  func.func @transform_25(%arg0: i32) -> (i32, i32) {
    %c0_i32 = arith.constant 0 : i32
    %c0_i32_0 = arith.constant 0 : i32
    %c0_i32_1 = arith.constant 0 : i32
    return %c0_i32, %c0_i32_0 : i32, i32
  }
  func.func @transform_26(%arg0: i32) -> (i32, i32) {
    %c0_i32 = arith.constant 0 : i32
    %c0_i32_0 = arith.constant 0 : i32
    %c0_i32_1 = arith.constant 0 : i32
    return %c0_i32, %c0_i32_0 : i32, i32
  }
  func.func @transform_27(%arg0: i32) -> (i32, i32) {
    %c0_i32 = arith.constant 0 : i32
    %c0_i32_0 = arith.constant 0 : i32
    %c0_i32_1 = arith.constant 0 : i32
    return %c0_i32, %c0_i32_0 : i32, i32
  }
  func.func @transform_28(%arg0: i32) -> (i32, i32) {
    %c0_i32 = arith.constant 0 : i32
    %c0_i32_0 = arith.constant 0 : i32
    %c0_i32_1 = arith.constant 0 : i32
    return %c0_i32, %c0_i32_0 : i32, i32
  }
  func.func @transform_29(%arg0: i32) -> (i32, i32) {
    %c0_i32 = arith.constant 0 : i32
    %c0_i32_0 = arith.constant 0 : i32
    %c0_i32_1 = arith.constant 0 : i32
    return %c0_i32, %c0_i32_0 : i32, i32
  }
  func.func @transform_30(%arg0: i32) -> (i32, i32) {
    %c0_i32 = arith.constant 0 : i32
    %c0_i32_0 = arith.constant 0 : i32
    %c0_i32_1 = arith.constant 0 : i32
    return %c0_i32, %c0_i32_0 : i32, i32
  }
  func.func @transform_31(%arg0: i32) -> (i32, i32) {
    %c0_i32 = arith.constant 0 : i32
    %c0_i32_0 = arith.constant 0 : i32
    return %arg0, %c0_i32 : i32, i32
  }
}

</mosaic_0001>

<llo_original>
// kernel: nbeats_prediction_forward.1
$region0: #{nbeats_prediction_forward.1}
  #allocation0 [shape = 'u32[]', space=smem, size = 0x4, offset = 0x4, fixed_abs, tag = 'smem constant byte address 0x4 - core index']
  #allocation1 [shape = 'u32[72,128]{1,0:T(1,128)}', space=vmem, size = 0x9000, scoped, tag = 'internal scratch']
  %s0 = inlined_call_operand.smem [shape: u32[32], index: -1, kind: input, shape index: {}]
  %s1 = sld [smem:[%s0]]
  %s2 = scalar_lea.smem %s0, 1
  %s3 = sld [smem:[%s2]]
  %s4 = scalar_lea.smem %s0, 2
  %s5 = sld [smem:[%s4]]
  %s6 = scalar_lea.smem %s0, 3
  %s7 = sld [smem:[%s6]]
  %s8 = scalar_lea.smem %s0, 4
  %s9 = sld [smem:[%s8]]
  %s10 = scalar_lea.smem %s0, 5
  %s11 = sld [smem:[%s10]]
  %s12 = scalar_lea.smem %s0, 6
  %s13 = sld [smem:[%s12]]
  %s14 = scalar_lea.smem %s0, 7
  %s15 = sld [smem:[%s14]]
  %s16 = scalar_lea.smem %s0, 8
  %s17 = sld [smem:[%s16]]
  %s18 = scalar_lea.smem %s0, 9
  %s19 = sld [smem:[%s18]]
  %s20 = scalar_lea.smem %s0, 10
  %s21 = sld [smem:[%s20]]
  %s22 = scalar_lea.smem %s0, 11
  %s23 = sld [smem:[%s22]]
  %s24 = scalar_lea.smem %s0, 12
  %s25 = sld [smem:[%s24]]
  %s26 = scalar_lea.smem %s0, 13
  %s27 = sld [smem:[%s26]]
  %s28 = scalar_lea.smem %s0, 14
  %s29 = sld [smem:[%s28]]
  %s30 = scalar_lea.smem %s0, 15
  %s31 = sld [smem:[%s30]]
  %s32 = scalar_lea.smem %s0, 16
  %s33 = sld [smem:[%s32]]
  %s34 = scalar_lea.smem %s0, 17
  %s35 = sld [smem:[%s34]]
  %s36 = scalar_lea.smem %s0, 18
  %s37 = sld [smem:[%s36]]
  %s38 = scalar_lea.smem %s0, 19
  %s39 = sld [smem:[%s38]]
  %s40 = scalar_lea.smem %s0, 20
  %s41 = sld [smem:[%s40]]
  %s42 = scalar_lea.smem %s0, 21
  %s43 = sld [smem:[%s42]]
  %s44 = scalar_lea.smem %s0, 22
  %s45 = sld [smem:[%s44]]
  %s46 = scalar_lea.smem %s0, 23
  %s47 = sld [smem:[%s46]]
  %s48 = scalar_lea.smem %s0, 24
  %s49 = sld [smem:[%s48]]
  %s50 = scalar_lea.smem %s0, 25
  %s51 = sld [smem:[%s50]]
  %s52 = scalar_lea.smem %s0, 26
  %s53 = sld [smem:[%s52]]
  %s54 = scalar_lea.smem %s0, 27
  %s55 = sld [smem:[%s54]]
  %s56 = scalar_lea.smem %s0, 28
  %s57 = sld [smem:[%s56]]
  %s58 = scalar_lea.smem %s0, 29
  %s59 = sld [smem:[%s58]]
  %s60 = scalar_lea.smem %s0, 30
  %s61 = sld [smem:[%s60]]
  %s62 = scalar_lea.smem %s0, 31
  %s63 = sld [smem:[%s62]]
  %s64 = sld [smem:[#allocation0]]
  $region134: #{nbeats_prediction_forward.1} parent=0
    _
  %s66 = ssub.s32 1, %s64
  %s67 = scalar_select 0, %s66, %s64
  $region1: #{nbeats_prediction_forward.1} parent=0
    #allocation2 [shape = 'u8[4096]{0}', space=vmem, size = 0x1000, scoped, tag = 'output window, operand 0, single buffered']
    #allocation3 [shape = 's32[1]{0}', space=sflag, size = 0x4, scoped, tag = 'scoped memory for nbeats_prediction_forward.1']
    %68 = vsyncpa [#allocation3], 0
    // Predicated region
    $region2: #{nbeats_prediction_forward.1} parent=1 // pred_check
      _
    $region3: #{nbeats_prediction_forward.1} parent=1 // pred_check_branch
      %70 = sbr.rel (0) target = $region5
    $region4: #{nbeats_prediction_forward.1} parent=1 // pred_region
      _
    $region5: #{nbeats_prediction_forward.1} parent=1 // pred_fallthru
      _
    // Predicated region
    $region6: #{nbeats_prediction_forward.1} parent=1 // pred_check
      _
    $region7: #{nbeats_prediction_forward.1} parent=1 // pred_check_branch
      %72 = sbr.rel (0) target = $region9
    $region8: #{nbeats_prediction_forward.1} parent=1 // pred_region
      _
    $region9: #{nbeats_prediction_forward.1} parent=1 // pred_fallthru
      _
    // Predicated region
    $region10: #{nbeats_prediction_forward.1} parent=1 // pred_check
      _
    $region11: #{nbeats_prediction_forward.1} parent=1 // pred_check_branch
      %74 = sbr.rel (0) target = $region13
    $region12: #{nbeats_prediction_forward.1} parent=1 // pred_region
      _
    $region13: #{nbeats_prediction_forward.1} parent=1 // pred_fallthru
      _
    // Predicated region
    $region14: #{nbeats_prediction_forward.1} parent=1 // pred_check
      _
    $region15: #{nbeats_prediction_forward.1} parent=1 // pred_check_branch
      %76 = sbr.rel (0) target = $region17
    $region16: #{nbeats_prediction_forward.1} parent=1 // pred_region
      _
    $region17: #{nbeats_prediction_forward.1} parent=1 // pred_fallthru
      _
    // Predicated region
    $region18: #{nbeats_prediction_forward.1} parent=1 // pred_check
      _
    $region19: #{nbeats_prediction_forward.1} parent=1 // pred_check_branch
      %78 = sbr.rel (0) target = $region21
    $region20: #{nbeats_prediction_forward.1} parent=1 // pred_region
      _
    $region21: #{nbeats_prediction_forward.1} parent=1 // pred_fallthru
      _
    // Predicated region
    $region22: #{nbeats_prediction_forward.1} parent=1 // pred_check
      _
    $region23: #{nbeats_prediction_forward.1} parent=1 // pred_check_branch
      %80 = sbr.rel (0) target = $region25
    $region24: #{nbeats_prediction_forward.1} parent=1 // pred_region
      _
    $region25: #{nbeats_prediction_forward.1} parent=1 // pred_fallthru
      _
    // Predicated region
    $region26: #{nbeats_prediction_forward.1} parent=1 // pred_check
      _
    $region27: #{nbeats_prediction_forward.1} parent=1 // pred_check_branch
      %82 = sbr.rel (0) target = $region29
    $region28: #{nbeats_prediction_forward.1} parent=1 // pred_region
      _
    $region29: #{nbeats_prediction_forward.1} parent=1 // pred_fallthru
      _
    // Predicated region
    $region30: #{nbeats_prediction_forward.1} parent=1 // pred_check
      _
    $region31: #{nbeats_prediction_forward.1} parent=1 // pred_check_branch
      %84 = sbr.rel (0) target = $region33
    $region32: #{nbeats_prediction_forward.1} parent=1 // pred_region
      _
    $region33: #{nbeats_prediction_forward.1} parent=1 // pred_fallthru
      _
    // Predicated region
    $region34: #{nbeats_prediction_forward.1} parent=1 // pred_check
      _
    $region35: #{nbeats_prediction_forward.1} parent=1 // pred_check_branch
      %86 = sbr.rel (0) target = $region37
    $region36: #{nbeats_prediction_forward.1} parent=1 // pred_region
      _
    $region37: #{nbeats_prediction_forward.1} parent=1 // pred_fallthru
      _
    // Predicated region
    $region38: #{nbeats_prediction_forward.1} parent=1 // pred_check
      _
    $region39: #{nbeats_prediction_forward.1} parent=1 // pred_check_branch
      %88 = sbr.rel (0) target = $region41
    $region40: #{nbeats_prediction_forward.1} parent=1 // pred_region
      _
    $region41: #{nbeats_prediction_forward.1} parent=1 // pred_fallthru
      _
    // Predicated region
    $region42: #{nbeats_prediction_forward.1} parent=1 // pred_check
      _
    $region43: #{nbeats_prediction_forward.1} parent=1 // pred_check_branch
      %90 = sbr.rel (0) target = $region45
    $region44: #{nbeats_prediction_forward.1} parent=1 // pred_region
      _
    $region45: #{nbeats_prediction_forward.1} parent=1 // pred_fallthru
      _
    // Predicated region
    $region46: #{nbeats_prediction_forward.1} parent=1 // pred_check
      _
    $region47: #{nbeats_prediction_forward.1} parent=1 // pred_check_branch
      %92 = sbr.rel (0) target = $region49
    $region48: #{nbeats_prediction_forward.1} parent=1 // pred_region
      _
    $region49: #{nbeats_prediction_forward.1} parent=1 // pred_fallthru
      _
    // Predicated region
    $region50: #{nbeats_prediction_forward.1} parent=1 // pred_check
      _
    $region51: #{nbeats_prediction_forward.1} parent=1 // pred_check_branch
      %94 = sbr.rel (0) target = $region53
    $region52: #{nbeats_prediction_forward.1} parent=1 // pred_region
      _
    $region53: #{nbeats_prediction_forward.1} parent=1 // pred_fallthru
      _
    // Predicated region
    $region54: #{nbeats_prediction_forward.1} parent=1 // pred_check
      _
    $region55: #{nbeats_prediction_forward.1} parent=1 // pred_check_branch
      %96 = sbr.rel (0) target = $region57
    $region56: #{nbeats_prediction_forward.1} parent=1 // pred_region
      _
    $region57: #{nbeats_prediction_forward.1} parent=1 // pred_fallthru
      _
    // Predicated region
    $region58: #{nbeats_prediction_forward.1} parent=1 // pred_check
      _
    $region59: #{nbeats_prediction_forward.1} parent=1 // pred_check_branch
      %98 = sbr.rel (0) target = $region61
    $region60: #{nbeats_prediction_forward.1} parent=1 // pred_region
      _
    $region61: #{nbeats_prediction_forward.1} parent=1 // pred_fallthru
      _
    // Predicated region
    $region62: #{nbeats_prediction_forward.1} parent=1 // pred_check
      _
    $region63: #{nbeats_prediction_forward.1} parent=1 // pred_check_branch
      %100 = sbr.rel (0) target = $region65
    $region64: #{nbeats_prediction_forward.1} parent=1 // pred_region
      _
    $region65: #{nbeats_prediction_forward.1} parent=1 // pred_fallthru
      _
    // Predicated region
    $region66: #{nbeats_prediction_forward.1} parent=1 // pred_check
      _
    $region67: #{nbeats_prediction_forward.1} parent=1 // pred_check_branch
      %102 = sbr.rel (0) target = $region69
    $region68: #{nbeats_prediction_forward.1} parent=1 // pred_region
      _
    $region69: #{nbeats_prediction_forward.1} parent=1 // pred_fallthru
      _
    // Predicated region
    $region70: #{nbeats_prediction_forward.1} parent=1 // pred_check
      _
    $region71: #{nbeats_prediction_forward.1} parent=1 // pred_check_branch
      %104 = sbr.rel (0) target = $region73
    $region72: #{nbeats_prediction_forward.1} parent=1 // pred_region
      _
    $region73: #{nbeats_prediction_forward.1} parent=1 // pred_fallthru
      _
    // Predicated region
    $region74: #{nbeats_prediction_forward.1} parent=1 // pred_check
      _
    $region75: #{nbeats_prediction_forward.1} parent=1 // pred_check_branch
      %106 = sbr.rel (0) target = $region77
    $region76: #{nbeats_prediction_forward.1} parent=1 // pred_region
      _
    $region77: #{nbeats_prediction_forward.1} parent=1 // pred_fallthru
      _
    // Predicated region
    $region78: #{nbeats_prediction_forward.1} parent=1 // pred_check
      _
    $region79: #{nbeats_prediction_forward.1} parent=1 // pred_check_branch
      %108 = sbr.rel (0) target = $region81
    $region80: #{nbeats_prediction_forward.1} parent=1 // pred_region
      _
    $region81: #{nbeats_prediction_forward.1} parent=1 // pred_fallthru
      _
    // Predicated region
    $region82: #{nbeats_prediction_forward.1} parent=1 // pred_check
      _
    $region83: #{nbeats_prediction_forward.1} parent=1 // pred_check_branch
      %110 = sbr.rel (0) target = $region85
    $region84: #{nbeats_prediction_forward.1} parent=1 // pred_region
      _
    $region85: #{nbeats_prediction_forward.1} parent=1 // pred_fallthru
      _
    // Predicated region
    $region86: #{nbeats_prediction_forward.1} parent=1 // pred_check
      _
    $region87: #{nbeats_prediction_forward.1} parent=1 // pred_check_branch
      %112 = sbr.rel (0) target = $region89
    $region88: #{nbeats_prediction_forward.1} parent=1 // pred_region
      _
    $region89: #{nbeats_prediction_forward.1} parent=1 // pred_fallthru
      _
    // Predicated region
    $region90: #{nbeats_prediction_forward.1} parent=1 // pred_check
      _
    $region91: #{nbeats_prediction_forward.1} parent=1 // pred_check_branch
      %114 = sbr.rel (0) target = $region93
    $region92: #{nbeats_prediction_forward.1} parent=1 // pred_region
      _
    $region93: #{nbeats_prediction_forward.1} parent=1 // pred_fallthru
      _
    // Predicated region
    $region94: #{nbeats_prediction_forward.1} parent=1 // pred_check
      _
    $region95: #{nbeats_prediction_forward.1} parent=1 // pred_check_branch
      %116 = sbr.rel (0) target = $region97
    $region96: #{nbeats_prediction_forward.1} parent=1 // pred_region
      _
    $region97: #{nbeats_prediction_forward.1} parent=1 // pred_fallthru
      _
    // Predicated region
    $region98: #{nbeats_prediction_forward.1} parent=1 // pred_check
      _
    $region99: #{nbeats_prediction_forward.1} parent=1 // pred_check_branch
      %118 = sbr.rel (0) target = $region101
    $region100: #{nbeats_prediction_forward.1} parent=1 // pred_region
      _
    $region101: #{nbeats_prediction_forward.1} parent=1 // pred_fallthru
      _
    // Predicated region
    $region102: #{nbeats_prediction_forward.1} parent=1 // pred_check
      _
    $region103: #{nbeats_prediction_forward.1} parent=1 // pred_check_branch
      %120 = sbr.rel (0) target = $region105
    $region104: #{nbeats_prediction_forward.1} parent=1 // pred_region
      _
    $region105: #{nbeats_prediction_forward.1} parent=1 // pred_fallthru
      _
    // Predicated region
    $region106: #{nbeats_prediction_forward.1} parent=1 // pred_check
      _
    $region107: #{nbeats_prediction_forward.1} parent=1 // pred_check_branch
      %122 = sbr.rel (0) target = $region109
    $region108: #{nbeats_prediction_forward.1} parent=1 // pred_region
      _
    $region109: #{nbeats_prediction_forward.1} parent=1 // pred_fallthru
      _
    // Predicated region
    $region110: #{nbeats_prediction_forward.1} parent=1 // pred_check
      _
    $region111: #{nbeats_prediction_forward.1} parent=1 // pred_check_branch
      %124 = sbr.rel (0) target = $region113
    $region112: #{nbeats_prediction_forward.1} parent=1 // pred_region
      _
    $region113: #{nbeats_prediction_forward.1} parent=1 // pred_fallthru
      _
    // Predicated region
    $region114: #{nbeats_prediction_forward.1} parent=1 // pred_check
      _
    $region115: #{nbeats_prediction_forward.1} parent=1 // pred_check_branch
      %126 = sbr.rel (0) target = $region117
    $region116: #{nbeats_prediction_forward.1} parent=1 // pred_region
      _
    $region117: #{nbeats_prediction_forward.1} parent=1 // pred_fallthru
      _
    // Predicated region
    $region118: #{nbeats_prediction_forward.1} parent=1 // pred_check
      _
    $region119: #{nbeats_prediction_forward.1} parent=1 // pred_check_branch
      %128 = sbr.rel (0) target = $region121
    $region120: #{nbeats_prediction_forward.1} parent=1 // pred_region
      _
    $region121: #{nbeats_prediction_forward.1} parent=1 // pred_fallthru
      _
    // Predicated region
    $region122: #{nbeats_prediction_forward.1} parent=1 // pred_check
      _
    $region123: #{nbeats_prediction_forward.1} parent=1 // pred_check_branch
      %130 = sbr.rel (0) target = $region125
    $region124: #{nbeats_prediction_forward.1} parent=1 // pred_region
      _
    $region125: #{nbeats_prediction_forward.1} parent=1 // pred_fallthru
      _
    %v131 = vld [vmem:[%s1] sm:$0xff]
    %v132 = vld [vmem:[%s3] sm:$0xff]
    %v133 = vld [vmem:[%s3 + $0x8] sm:$0xff]
    %v134 = vld [vmem:[%s5] sm:$0x1]
    %v136 = vperm.slane %v134, 0
    %vm138 = vcmask 130048
    %v140 = vsel %vm138, %v131, 0
    %142 = vmatpush.msra.mxu0 0.0
    %143 = vmatpush.msra.mxu0 0.0
    %144 = vmatpush.msra.mxu0 0.0
    %145 = vmatpush.msra.mxu0 0.0
    %146 = vmatpush.msra.mxu0 0.0
    %147 = vmatpush.msra.mxu0 0.0
    %148 = vmatpush.msra.mxu0 0.0
    %149 = vmatpush.msra.mxu0 0.0
    %150 = vmatpush.msra.mxu0 0.0
    %151 = vmatpush.msra.mxu0 0.0
    %152 = vmatpush.msra.mxu0 0.0
    %153 = vmatpush.msra.mxu0 0.0
    %154 = vmatpush.msra.mxu0 0.0
    %155 = vmatpush.msra.mxu0 0.0
    %156 = vmatpush.msra.mxu0 %v133
    %157 = vmatpush.msra.mxu0 %v132
    %158 = vmatmul.f32.gmra.mxu0 %v140
    %v159 = vpop.f32.mrf.mxu0
    %v160 = vadd.f32 %v136, %v159
    %161 = vdwg.mxu0
    %v162 = vmax.f32 %v160, 0.0
    %v163 = vld [vmem:[%s7] sm:$0xff]
    %v164 = vld [vmem:[%s7 + $0x8] sm:$0xff]
    %v165 = vld [vmem:[%s7 + $0x10] sm:$0xff]
    %v166 = vld [vmem:[%s7 + $0x18] sm:$0xff]
    %v167 = vld [vmem:[%s9] sm:$0x1]
    %v169 = vperm.slane %v167, 0
    %vm171 = vcmask 261120
    %v173 = vsel %vm171, %v162, 0
    %175 = vmatpush.msra.mxu0 0.0
    %176 = vmatpush.msra.mxu0 0.0
    %177 = vmatpush.msra.mxu0 0.0
    %178 = vmatpush.msra.mxu0 0.0
    %179 = vmatpush.msra.mxu0 0.0
    %180 = vmatpush.msra.mxu0 0.0
    %181 = vmatpush.msra.mxu0 0.0
    %182 = vmatpush.msra.mxu0 0.0
    %183 = vmatpush.msra.mxu0 0.0
    %184 = vmatpush.msra.mxu0 0.0
    %185 = vmatpush.msra.mxu0 0.0
    %186 = vmatpush.msra.mxu0 0.0
    %187 = vmatpush.msra.mxu0 %v166
    %188 = vmatpush.msra.mxu0 %v165
    %189 = vmatpush.msra.mxu0 %v164
    %190 = vmatpush.msra.mxu0 %v163
    %191 = vmatmul.f32.gmra.mxu0 %v173
    %v192 = vpop.f32.mrf.mxu0
    %v193 = vadd.f32 %v169, %v192
    %194 = vdwg.mxu0
    %v195 = vmax.f32 %v193, 0.0
    %v196 = vld [vmem:[%s11] sm:$0xff]
    %v197 = vld [vmem:[%s11 + $0x8] sm:$0xff]
    %v198 = vld [vmem:[%s11 + $0x10] sm:$0xff]
    %v199 = vld [vmem:[%s11 + $0x18] sm:$0xff]
    %v200 = vld [vmem:[%s13] sm:$0xff]
    %v201 = vld [vmem:[%s13 + $0x8] sm:$0xff]
    %v202 = vld [vmem:[%s13 + $0x10] sm:$0xff]
    %v203 = vld [vmem:[%s13 + $0x18] sm:$0xff]
    %v204 = vld [vmem:[%s15] sm:$0xff]
    %v205 = vld [vmem:[%s17] sm:$0xff]
    %v206 = vld [vmem:[%s19] sm:$0x1]
    %v207 = vld [vmem:[%s21] sm:$0x1]
    %v209 = vsel %vm171, %v195, 0
    %211 = vmatpush.msra.mxu0 0.0
    %212 = vmatpush.msra.mxu0 0.0
    %213 = vmatpush.msra.mxu0 0.0
    %214 = vmatpush.msra.mxu0 0.0
    %215 = vmatpush.msra.mxu0 0.0
    %216 = vmatpush.msra.mxu0 0.0
    %217 = vmatpush.msra.mxu0 0.0
    %218 = vmatpush.msra.mxu0 0.0
    %219 = vmatpush.msra.mxu0 0.0
    %220 = vmatpush.msra.mxu0 0.0
    %221 = vmatpush.msra.mxu0 0.0
    %222 = vmatpush.msra.mxu0 0.0
    %223 = vmatpush.msra.mxu0 %v199
    %224 = vmatpush.msra.mxu0 %v198
    %225 = vmatpush.msra.mxu0 %v197
    %226 = vmatpush.msra.mxu0 %v196
    %227 = vmatmul.f32.gmra.mxu0 %v209
    %v228 = vpop.f32.mrf.mxu0
    %v229 = vadd.f32 0.0, %v228
    %230 = vdwg.mxu0
    %231 = vmatpush.msra.mxu0 0.0
    %232 = vmatpush.msra.mxu0 0.0
    %233 = vmatpush.msra.mxu0 0.0
    %234 = vmatpush.msra.mxu0 0.0
    %235 = vmatpush.msra.mxu0 0.0
    %236 = vmatpush.msra.mxu0 0.0
    %237 = vmatpush.msra.mxu0 0.0
    %238 = vmatpush.msra.mxu0 0.0
    %239 = vmatpush.msra.mxu0 0.0
    %240 = vmatpush.msra.mxu0 0.0
    %241 = vmatpush.msra.mxu0 0.0
    %242 = vmatpush.msra.mxu0 0.0
    %243 = vmatpush.msra.mxu0 %v203
    %244 = vmatpush.msra.mxu0 %v202
    %245 = vmatpush.msra.mxu0 %v201
    %246 = vmatpush.msra.mxu0 %v200
    %247 = vmatmul.f32.gmra.mxu0 %v209
    %v248 = vpop.f32.mrf.mxu0
    %v249 = vadd.f32 0.0, %v248
    %250 = vdwg.mxu0
    %v251 = vmax.f32 %v229, 0.0
    %v252 = vmax.f32 %v249, 0.0
    %v254 = vperm.slane %v206, 0
    %vm256 = vcmask 64512
    %v258 = vsel %vm256, %v251, 0
    %260 = vmatpush.msra.mxu0 0.0
    %261 = vmatpush.msra.mxu0 0.0
    %262 = vmatpush.msra.mxu0 0.0
    %263 = vmatpush.msra.mxu0 0.0
    %264 = vmatpush.msra.mxu0 0.0
    %265 = vmatpush.msra.mxu0 0.0
    %266 = vmatpush.msra.mxu0 0.0
    %267 = vmatpush.msra.mxu0 0.0
    %268 = vmatpush.msra.mxu0 0.0
    %269 = vmatpush.msra.mxu0 0.0
    %270 = vmatpush.msra.mxu0 0.0
    %271 = vmatpush.msra.mxu0 0.0
    %272 = vmatpush.msra.mxu0 0.0
    %273 = vmatpush.msra.mxu0 0.0
    %274 = vmatpush.msra.mxu0 0.0
    %275 = vmatpush.msra.mxu0 %v204
    %276 = vmatmul.f32.gmra.mxu0 %v258
    %v277 = vpop.f32.mrf.mxu0
    %v278 = vadd.f32 %v254, %v277
    %279 = vdwg.mxu0
    %v281 = vperm.slane %v207, 0
    %v284 = vsel %vm256, %v252, 0
    %286 = vmatpush.msra.mxu0 0.0
    %287 = vmatpush.msra.mxu0 0.0
    %288 = vmatpush.msra.mxu0 0.0
    %289 = vmatpush.msra.mxu0 0.0
    %290 = vmatpush.msra.mxu0 0.0
    %291 = vmatpush.msra.mxu0 0.0
    %292 = vmatpush.msra.mxu0 0.0
    %293 = vmatpush.msra.mxu0 0.0
    %294 = vmatpush.msra.mxu0 0.0
    %295 = vmatpush.msra.mxu0 0.0
    %296 = vmatpush.msra.mxu0 0.0
    %297 = vmatpush.msra.mxu0 0.0
    %298 = vmatpush.msra.mxu0 0.0
    %299 = vmatpush.msra.mxu0 0.0
    %300 = vmatpush.msra.mxu0 0.0
    %301 = vmatpush.msra.mxu0 %v205
    %302 = vmatmul.f32.gmra.mxu0 %v284
    %v303 = vpop.f32.mrf.mxu0
    %v304 = vadd.f32 %v281, %v303
    %305 = vdwg.mxu0
    %v306 = vsub.f32 %v131, %v278
    %v307 = vld [vmem:[%s23] sm:$0xff]
    %v308 = vld [vmem:[%s23 + $0x8] sm:$0xff]
    %v309 = vld [vmem:[%s25] sm:$0x1]
    %v311 = vperm.slane %v309, 0
    %v314 = vsel %vm138, %v306, 0
    %316 = vmatpush.msra.mxu0 0.0
    %317 = vmatpush.msra.mxu0 0.0
    %318 = vmatpush.msra.mxu0 0.0
    %319 = vmatpush.msra.mxu0 0.0
    %320 = vmatpush.msra.mxu0 0.0
    %321 = vmatpush.msra.mxu0 0.0
    %322 = vmatpush.msra.mxu0 0.0
    %323 = vmatpush.msra.mxu0 0.0
    %324 = vmatpush.msra.mxu0 0.0
    %325 = vmatpush.msra.mxu0 0.0
    %326 = vmatpush.msra.mxu0 0.0
    %327 = vmatpush.msra.mxu0 0.0
    %328 = vmatpush.msra.mxu0 0.0
    %329 = vmatpush.msra.mxu0 0.0
    %330 = vmatpush.msra.mxu0 %v308
    %331 = vmatpush.msra.mxu0 %v307
    %332 = vmatmul.f32.gmra.mxu0 %v314
    %v333 = vpop.f32.mrf.mxu0
    %v334 = vadd.f32 %v311, %v333
    %335 = vdwg.mxu0
    %v336 = vmax.f32 %v334, 0.0
    %v337 = vld [vmem:[%s27] sm:$0xff]
    %v338 = vld [vmem:[%s27 + $0x8] sm:$0xff]
    %v339 = vld [vmem:[%s27 + $0x10] sm:$0xff]
    %v340 = vld [vmem:[%s27 + $0x18] sm:$0xff]
    %v341 = vld [vmem:[%s29] sm:$0x1]
    %v343 = vperm.slane %v341, 0
    %v346 = vsel %vm171, %v336, 0
    %348 = vmatpush.msra.mxu0 0.0
    %349 = vmatpush.msra.mxu0 0.0
    %350 = vmatpush.msra.mxu0 0.0
    %351 = vmatpush.msra.mxu0 0.0
    %352 = vmatpush.msra.mxu0 0.0
    %353 = vmatpush.msra.mxu0 0.0
    %354 = vmatpush.msra.mxu0 0.0
    %355 = vmatpush.msra.mxu0 0.0
    %356 = vmatpush.msra.mxu0 0.0
    %357 = vmatpush.msra.mxu0 0.0
    %358 = vmatpush.msra.mxu0 0.0
    %359 = vmatpush.msra.mxu0 0.0
    %360 = vmatpush.msra.mxu0 %v340
    %361 = vmatpush.msra.mxu0 %v339
    %362 = vmatpush.msra.mxu0 %v338
    %363 = vmatpush.msra.mxu0 %v337
    %364 = vmatmul.f32.gmra.mxu0 %v346
    %v365 = vpop.f32.mrf.mxu0
    %v366 = vadd.f32 %v343, %v365
    %367 = vdwg.mxu0
    %v368 = vmax.f32 %v366, 0.0
    %v369 = vld [vmem:[%s31] sm:$0xff]
    %v370 = vld [vmem:[%s31 + $0x8] sm:$0xff]
    %v371 = vld [vmem:[%s31 + $0x10] sm:$0xff]
    %v372 = vld [vmem:[%s31 + $0x18] sm:$0xff]
    %v373 = vld [vmem:[%s33] sm:$0xff]
    %v374 = vld [vmem:[%s33 + $0x8] sm:$0xff]
    %v375 = vld [vmem:[%s33 + $0x10] sm:$0xff]
    %v376 = vld [vmem:[%s33 + $0x18] sm:$0xff]
    %v377 = vld [vmem:[%s35] sm:$0xff]
    %v378 = vld [vmem:[%s37] sm:$0xff]
    %v379 = vld [vmem:[%s39] sm:$0x1]
    %v380 = vld [vmem:[%s41] sm:$0x1]
    %v382 = vsel %vm171, %v368, 0
    %384 = vmatpush.msra.mxu0 0.0
    %385 = vmatpush.msra.mxu0 0.0
    %386 = vmatpush.msra.mxu0 0.0
    %387 = vmatpush.msra.mxu0 0.0
    %388 = vmatpush.msra.mxu0 0.0
    %389 = vmatpush.msra.mxu0 0.0
    %390 = vmatpush.msra.mxu0 0.0
    %391 = vmatpush.msra.mxu0 0.0
    %392 = vmatpush.msra.mxu0 0.0
    %393 = vmatpush.msra.mxu0 0.0
    %394 = vmatpush.msra.mxu0 0.0
    %395 = vmatpush.msra.mxu0 0.0
    %396 = vmatpush.msra.mxu0 %v372
    %397 = vmatpush.msra.mxu0 %v371
    %398 = vmatpush.msra.mxu0 %v370
    %399 = vmatpush.msra.mxu0 %v369
    %400 = vmatmul.f32.gmra.mxu0 %v382
    %v401 = vpop.f32.mrf.mxu0
    %v402 = vadd.f32 0.0, %v401
    %403 = vdwg.mxu0
    %404 = vmatpush.msra.mxu0 0.0
    %405 = vmatpush.msra.mxu0 0.0
    %406 = vmatpush.msra.mxu0 0.0
    %407 = vmatpush.msra.mxu0 0.0
    %408 = vmatpush.msra.mxu0 0.0
    %409 = vmatpush.msra.mxu0 0.0
    %410 = vmatpush.msra.mxu0 0.0
    %411 = vmatpush.msra.mxu0 0.0
    %412 = vmatpush.msra.mxu0 0.0
    %413 = vmatpush.msra.mxu0 0.0
    %414 = vmatpush.msra.mxu0 0.0
    %415 = vmatpush.msra.mxu0 0.0
    %416 = vmatpush.msra.mxu0 %v376
    %417 = vmatpush.msra.mxu0 %v375
    %418 = vmatpush.msra.mxu0 %v374
    %419 = vmatpush.msra.mxu0 %v373
    %420 = vmatmul.f32.gmra.mxu0 %v382
    %v421 = vpop.f32.mrf.mxu0
    %v422 = vadd.f32 0.0, %v421
    %423 = vdwg.mxu0
    %v425 = vperm.slane %v379, 0
    %v428 = vsel %vm256, %v402, 0
    %430 = vmatpush.msra.mxu0 0.0
    %431 = vmatpush.msra.mxu0 0.0
    %432 = vmatpush.msra.mxu0 0.0
    %433 = vmatpush.msra.mxu0 0.0
    %434 = vmatpush.msra.mxu0 0.0
    %435 = vmatpush.msra.mxu0 0.0
    %436 = vmatpush.msra.mxu0 0.0
    %437 = vmatpush.msra.mxu0 0.0
    %438 = vmatpush.msra.mxu0 0.0
    %439 = vmatpush.msra.mxu0 0.0
    %440 = vmatpush.msra.mxu0 0.0
    %441 = vmatpush.msra.mxu0 0.0
    %442 = vmatpush.msra.mxu0 0.0
    %443 = vmatpush.msra.mxu0 0.0
    %444 = vmatpush.msra.mxu0 0.0
    %445 = vmatpush.msra.mxu0 %v377
    %446 = vmatmul.f32.gmra.mxu0 %v428
    %v447 = vpop.f32.mrf.mxu0
    %v448 = vadd.f32 %v425, %v447
    %449 = vdwg.mxu0
    %v451 = vperm.slane %v380, 0
    %v454 = vsel %vm256, %v422, 0
    %456 = vmatpush.msra.mxu0 0.0
    %457 = vmatpush.msra.mxu0 0.0
    %458 = vmatpush.msra.mxu0 0.0
    %459 = vmatpush.msra.mxu0 0.0
    %460 = vmatpush.msra.mxu0 0.0
    %461 = vmatpush.msra.mxu0 0.0
    %462 = vmatpush.msra.mxu0 0.0
    %463 = vmatpush.msra.mxu0 0.0
    %464 = vmatpush.msra.mxu0 0.0
    %465 = vmatpush.msra.mxu0 0.0
    %466 = vmatpush.msra.mxu0 0.0
    %467 = vmatpush.msra.mxu0 0.0
    %468 = vmatpush.msra.mxu0 0.0
    %469 = vmatpush.msra.mxu0 0.0
    %470 = vmatpush.msra.mxu0 0.0
    %471 = vmatpush.msra.mxu0 %v378
    %472 = vmatmul.f32.gmra.mxu0 %v454
    %v473 = vpop.f32.mrf.mxu0
    %v474 = vadd.f32 %v451, %v473
    %475 = vdwg.mxu0
    %v476 = vsub.f32 %v306, %v448
    %v477 = vadd.f32 %v304, %v474
    %v478 = vld [vmem:[%s43] sm:$0xff]
    %v479 = vld [vmem:[%s43 + $0x8] sm:$0xff]
    %v480 = vld [vmem:[%s45] sm:$0x1]
    %v482 = vperm.slane %v480, 0
    %v485 = vsel %vm138, %v476, 0
    %487 = vmatpush.msra.mxu0 0.0
    %488 = vmatpush.msra.mxu0 0.0
    %489 = vmatpush.msra.mxu0 0.0
    %490 = vmatpush.msra.mxu0 0.0
    %491 = vmatpush.msra.mxu0 0.0
    %492 = vmatpush.msra.mxu0 0.0
    %493 = vmatpush.msra.mxu0 0.0
    %494 = vmatpush.msra.mxu0 0.0
    %495 = vmatpush.msra.mxu0 0.0
    %496 = vmatpush.msra.mxu0 0.0
    %497 = vmatpush.msra.mxu0 0.0
    %498 = vmatpush.msra.mxu0 0.0
    %499 = vmatpush.msra.mxu0 0.0
    %500 = vmatpush.msra.mxu0 0.0
    %501 = vmatpush.msra.mxu0 %v479
    %502 = vmatpush.msra.mxu0 %v478
    %503 = vmatmul.f32.gmra.mxu0 %v485
    %v504 = vpop.f32.mrf.mxu0
    %v505 = vadd.f32 %v482, %v504
    %506 = vdwg.mxu0
    %v507 = vmax.f32 %v505, 0.0
    %v508 = vld [vmem:[%s47] sm:$0xff]
    %v509 = vld [vmem:[%s47 + $0x8] sm:$0xff]
    %v510 = vld [vmem:[%s47 + $0x10] sm:$0xff]
    %v511 = vld [vmem:[%s47 + $0x18] sm:$0xff]
    %v512 = vld [vmem:[%s49] sm:$0x1]
    %v514 = vperm.slane %v512, 0
    %v517 = vsel %vm171, %v507, 0
    %519 = vmatpush.msra.mxu0 0.0
    %520 = vmatpush.msra.mxu0 0.0
    %521 = vmatpush.msra.mxu0 0.0
    %522 = vmatpush.msra.mxu0 0.0
    %523 = vmatpush.msra.mxu0 0.0
    %524 = vmatpush.msra.mxu0 0.0
    %525 = vmatpush.msra.mxu0 0.0
    %526 = vmatpush.msra.mxu0 0.0
    %527 = vmatpush.msra.mxu0 0.0
    %528 = vmatpush.msra.mxu0 0.0
    %529 = vmatpush.msra.mxu0 0.0
    %530 = vmatpush.msra.mxu0 0.0
    %531 = vmatpush.msra.mxu0 %v511
    %532 = vmatpush.msra.mxu0 %v510
    %533 = vmatpush.msra.mxu0 %v509
    %534 = vmatpush.msra.mxu0 %v508
    %535 = vmatmul.f32.gmra.mxu0 %v517
    %v536 = vpop.f32.mrf.mxu0
    %v537 = vadd.f32 %v514, %v536
    %538 = vdwg.mxu0
    %v539 = vmax.f32 %v537, 0.0
    %v540 = vld [vmem:[%s53] sm:$0xff]
    %v541 = vld [vmem:[%s53 + $0x8] sm:$0xff]
    %v542 = vld [vmem:[%s53 + $0x10] sm:$0xff]
    %v543 = vld [vmem:[%s53 + $0x18] sm:$0xff]
    %v544 = vld [vmem:[%s57] sm:$0xf]
    %v545 = vld [vmem:[%s61] sm:$0x1]
    %v547 = vsel %vm171, %v539, 0
    %549 = vmatpush.msra.mxu0 0.0
    %550 = vmatpush.msra.mxu0 0.0
    %551 = vmatpush.msra.mxu0 0.0
    %552 = vmatpush.msra.mxu0 0.0
    %553 = vmatpush.msra.mxu0 0.0
    %554 = vmatpush.msra.mxu0 0.0
    %555 = vmatpush.msra.mxu0 0.0
    %556 = vmatpush.msra.mxu0 0.0
    %557 = vmatpush.msra.mxu0 0.0
    %558 = vmatpush.msra.mxu0 0.0
    %559 = vmatpush.msra.mxu0 0.0
    %560 = vmatpush.msra.mxu0 0.0
    %561 = vmatpush.msra.mxu0 %v543
    %562 = vmatpush.msra.mxu0 %v542
    %563 = vmatpush.msra.mxu0 %v541
    %564 = vmatpush.msra.mxu0 %v540
    %565 = vmatmul.f32.gmra.mxu0 %v547
    %v566 = vpop.f32.mrf.mxu0
    %v567 = vadd.f32 0.0, %v566
    %568 = vdwg.mxu0
    %v570 = vperm.slane %v545, 0
    %vm572 = vcmask 31744
    %v574 = vsel %vm572, %v567, 0
    %vm576 = vcmask 1043456
    %v578 = vsel %vm576, %v544, 0
    %580 = vmatpush.msra.mxu0 0.0
    %581 = vmatpush.msra.mxu0 0.0
    %582 = vmatpush.msra.mxu0 0.0
    %583 = vmatpush.msra.mxu0 0.0
    %584 = vmatpush.msra.mxu0 0.0
    %585 = vmatpush.msra.mxu0 0.0
    %586 = vmatpush.msra.mxu0 0.0
    %587 = vmatpush.msra.mxu0 0.0
    %588 = vmatpush.msra.mxu0 0.0
    %589 = vmatpush.msra.mxu0 0.0
    %590 = vmatpush.msra.mxu0 0.0
    %591 = vmatpush.msra.mxu0 0.0
    %592 = vmatpush.msra.mxu0 0.0
    %593 = vmatpush.msra.mxu0 0.0
    %594 = vmatpush.msra.mxu0 0.0
    %595 = vmatpush.msra.mxu0 %v578
    %596 = vmatmul.f32.gmra.mxu0 %v574
    %v597 = vpop.f32.mrf.mxu0
    %v598 = vadd.f32 %v570, %v597
    %599 = vdwg.mxu0
    %v600 = vadd.f32 %v477, %v598
    %601 = vst.msk [vmem:[#allocation2] sm:$0xff] %vm256, %v600
    // Predicated region
    $region126: #{nbeats_prediction_forward.1} parent=1 // pred_check
      _
    $region127: #{nbeats_prediction_forward.1} parent=1 // pred_check_branch
      %603 = sbr.rel (0) target = $region129
    $region128: #{nbeats_prediction_forward.1} parent=1 // pred_region
      %605 = vsyncadd [#allocation3], 0
      %s607 = sshll.u32 [#allocation2], 4
      %s608 = int_to_ptr.vmem [resolvable:$true] %s607
      %s609 = sshll.u32 %s63, 4
      %s610 = int_to_ptr.hbm [resolvable:$true] %s609
      %612 = dma.vmem_to_hbm [thread:$0]  %s608, 128, %s610, [#allocation3]
    $region129: #{nbeats_prediction_forward.1} parent=1 // pred_fallthru
      _
    // Predicated region
    $region130: #{nbeats_prediction_forward.1} parent=1 // pred_check
      _
    $region131: #{nbeats_prediction_forward.1} parent=1 // pred_check_branch
      %614 = sbr.rel (0) target = $region133
    $region132: #{nbeats_prediction_forward.1} parent=1 // pred_region
      %616 = dma.done [#allocation3], 128
    $region133: #{nbeats_prediction_forward.1} parent=1 // pred_fallthru
      _
    %617 = vsyncpa [#allocation3], 1

</llo_original>
